<compile_context>
chip_gen: v6e
topology: v6e:2x2x1
jax: 0.10.0
libtpu: 0.0.40
codegen_flags: <defaults>
</compile_context>

<pallas_src>
import jax
import jax.numpy as jnp
from jax.experimental import pallas as pl
from jax.experimental.pallas import tpu as pltpu


def _identity_kernel(x_ref, o_ref):
    # Copy the current VMEM tile. Whole-tile load/store -> full-lane vst.
    o_ref[...] = x_ref[...]


# Below this size a kernel launch (custom-call + ~0.35us/grid-step) is strictly
# slower than just returning x.
_SMALL_BYTES = 256 * 1024
# Target block size for the copy: big enough to amortize per-step overhead,
# small enough that in+out double-buffering (4 blocks) fits v5e's 16 MiB scoped
# VMEM default and v7x's 64 MiB physical VMEM with lots of headroom.
_TARGET_BLOCK_BYTES = 2 << 20
# Lane-dense candidates (largest first); all multiples of 128.
_LANE_CANDIDATES = (8192, 4096, 2048, 1024, 512, 256, 128)


def _sublane_multiple(itemsize: int) -> int:
    # f32 -> 8, bf16/f16 -> 16, int8/fp8 -> 32 (packed sublane layout).
    return {4: 8, 2: 16, 1: 32}.get(itemsize, 8)


def _choose_layout(n_elems: int, itemsize: int):
    """Pick (lane, rows, tile_rows) for a lane-dense 2D view of n_elems."""
    lane = None
    for cand in _LANE_CANDIDATES:
        if n_elems % cand == 0:
            lane = cand
            break
    if lane is None:
        return None  # not 128-divisible: caller falls back to pass-through

    rows = n_elems // lane
    sub = _sublane_multiple(itemsize)

    # Size the block by bytes, rounded down to the dtype sublane multiple.
    target_rows = max(1, _TARGET_BLOCK_BYTES // (lane * itemsize))
    tile_rows = min(rows, target_rows)
    if tile_rows >= sub:
        tile_rows = (tile_rows // sub) * sub
    else:
        # Tiny row count: full second-to-last dim is always a legal block dim.
        tile_rows = rows

    # Guarantee >=2 grid steps when there is enough work, so the "parallel"
    # grid axis can be sharded across both TensorCores on v7x.
    if pl.cdiv(rows, tile_rows) == 1 and rows >= 2 * sub:
        tile_rows = sub * pl.cdiv(pl.cdiv(rows, 2), sub)

    return lane, rows, tile_rows


def identity(x: jax.Array, *, force_kernel: bool = False) -> jax.Array:
    """Pallas implementation of Identity.forward: returns x unchanged."""
    if x.size == 0:
        return x

    nbytes = x.size * x.dtype.itemsize
    if not force_kernel and nbytes < _SMALL_BYTES:
        # Identity needs no work at all; skip the kernel for small inputs.
        return x

    layout = _choose_layout(x.size, x.dtype.itemsize)
    if layout is None:
        # Element count not 128-lane divisible: a copy kernel would only add
        # masked partial stores; pass-through is faster and bit-exact.
        return x

    lane, rows, tile_rows = layout
    x2 = x.reshape(rows, lane)

    tile_bytes = tile_rows * lane * x.dtype.itemsize
    # in + out, double-buffered (4 blocks) plus headroom; <= scoped-VMEM
    # defaults on v5e (16 MiB), v6e (32 MiB) and v7x (32 MiB).
    vmem_limit = int(min(32 << 20, max(8 << 20, 8 * tile_bytes)))

    out2 = pl.pallas_call(
        _identity_kernel,
        out_shape=jax.ShapeDtypeStruct((rows, lane), x.dtype),
        grid_spec=pl.GridSpec(
            grid=(pl.cdiv(rows, tile_rows),),
            in_specs=[pl.BlockSpec((tile_rows, lane), lambda i: (i, 0))],
            out_specs=pl.BlockSpec((tile_rows, lane), lambda i: (i, 0)),
        ),
        # Let XLA reuse the input buffer for the output (no fresh HBM alloc;
        # copy elided entirely when the producer buffer is dead).
        input_output_aliases={0: 0},
        compiler_params=pltpu.CompilerParams(
            dimension_semantics=("parallel",),
            vmem_limit_bytes=vmem_limit,
        ),
    )(x2)

    return out2.reshape(x.shape)


if __name__ == "__main__":
    key = jax.random.PRNGKey(0)
    # Small NCHW-shaped input consistent with a conv-style pipeline.
    x = jax.random.normal(key, (2, 4, 16, 16), dtype=jnp.float32)

    # Default path: small input -> pure pass-through (no kernel launched).
    y_fast = identity(x)
    jax.block_until_ready(y_fast)
    assert y_fast.shape == x.shape
    assert y_fast.dtype == x.dtype
    assert bool(jnp.all(y_fast == x))

    # Kernel path: force the lane-dense Pallas copy so the kernel is exercised.
    y_kernel = identity(x, force_kernel=True)
    jax.block_until_ready(y_kernel)
    assert y_kernel.shape == x.shape
    assert y_kernel.dtype == x.dtype
    assert bool(jnp.all(y_kernel == x))

    print("KERNEL_OK")
</pallas_src>

<mosaic_0001>
module attributes {stable_mosaic.version = 11 : i64} {
  func.func @_identity_kernel(%arg0: i32, %arg1: memref<1x2048xf32, #tpu.memory_space<vmem>>, %arg2: memref<1x2048xf32, #tpu.memory_space<vmem>>) attributes {dimension_semantics = [#tpu.dimension_semantics<parallel>], iteration_bounds = array<i64: 1>, scalar_prefetch = 0 : i64, scratch_operands = 0 : i64, tpu.core_type = #tpu.core_type<tc>, window_params = [{transform_indices = @transform_0, window_bounds = array<i64: 1, 2048>}, {transform_indices = @transform_1, window_bounds = array<i64: 1, 2048>}]} {
    %c0 = arith.constant 0 : index
    %c0_0 = arith.constant 0 : index
    %0 = vector.load %arg1[%c0, %c0_0] : memref<1x2048xf32, #tpu.memory_space<vmem>>, vector<1x2048xf32>
    %c0_1 = arith.constant 0 : index
    %c0_2 = arith.constant 0 : index
    %1 = vector.load %arg2[%c0_1, %c0_2] : memref<1x2048xf32, #tpu.memory_space<vmem>>, vector<1x2048xf32>
    tpu.vector_store %arg2[%c0_1, %c0_2], %0 {strides = array<i32>} : memref<1x2048xf32, #tpu.memory_space<vmem>>, vector<1x2048xf32>,
    return
  }
  func.func @transform_0(%arg0: i32) -> (i32, i32) {
    %c0_i32 = arith.constant 0 : i32
    %c0_i32_0 = arith.constant 0 : i32
    return %arg0, %c0_i32 : i32, i32
  }
  func.func @transform_1(%arg0: i32) -> (i32, i32) {
    %c0_i32 = arith.constant 0 : i32
    %c0_i32_0 = arith.constant 0 : i32
    return %arg0, %c0_i32 : i32, i32
  }
}

</mosaic_0001>

<llo_original>
// kernel: tpu_custom_call.1
$region0: #{tpu_custom_call.1}
  #allocation0 [shape = 'u32[]', space=smem, size = 0x4, offset = 0x4, fixed_abs, tag = 'smem constant byte address 0x4 - core index']
  #allocation1 [shape = 'u32[144,128]{1,0:T(1,128)}', space=vmem, size = 0x12000, scoped, tag = 'internal scratch']
  %s0 = inlined_call_operand.hbm [shape: f32[1,2048], index: 0, kind: input, shape index: {}, may-alias: {0,1}]
  %s1 = inlined_call_operand.hbm [shape: f32[1,2048], index: 1, kind: output, shape index: {}, may-alias: {0,1}]
  %s2 = sld [smem:[#allocation0]]
  $region18: #{tpu_custom_call.1} parent=0
    _
  %s4 = ssub.s32 1, %s2
  %s5 = scalar_select 0, %s4, %s2
  $region1: #{tpu_custom_call.1} parent=0
    #allocation2 [shape = 'u8[8192]{0}', space=vmem, size = 0x2000, scoped, tag = 'input window, operand 0, single buffered']
    #allocation3 [shape = 's32[1]{0}', space=sflag, size = 0x4, scoped, tag = 'scoped memory for tpu_custom_call.1']
    #allocation4 [shape = 's32[1]{0}', space=sflag, size = 0x4, scoped, tag = 'scoped memory for tpu_custom_call.1']
    #allocation5 [shape = 'u8[8192]{0}', space=vmem, size = 0x2000, scoped, tag = 'output window, operand 0, single buffered']
    %6 = vsyncpa [#allocation3], 0
    %7 = vsyncpa [#allocation4], 0
    // Predicated region
    $region2: #{tpu_custom_call.1} parent=1 // pred_check
      _
    $region3: #{tpu_custom_call.1} parent=1 // pred_check_branch
      %9 = sbr.rel (0) target = $region5
    $region4: #{tpu_custom_call.1} parent=1 // pred_region
      %s11 = ssub.s32 256, 256
      %12 = vsyncadd [#allocation3], %s11
      %s14 = sshll.u32 [#allocation2], 4
      %s15 = int_to_ptr.vmem [resolvable:$true] %s14
      %17 = dma.hbm_to_vmem [thread:$0]  %s0, 256, %s15, [#allocation3]
    $region5: #{tpu_custom_call.1} parent=1 // pred_fallthru
      _
    // Predicated region
    $region6: #{tpu_custom_call.1} parent=1 // pred_check
      _
    $region7: #{tpu_custom_call.1} parent=1 // pred_check_branch
      %19 = sbr.rel (0) target = $region9
    $region8: #{tpu_custom_call.1} parent=1 // pred_region
      %20 = dma.done [#allocation3], 256
    $region9: #{tpu_custom_call.1} parent=1 // pred_fallthru
      _
    %v21 = vld [vmem:[#allocation2] sm:$0xff]
    %v22 = vld [vmem:[#allocation2 + $0x8] sm:$0xff]
    %23 = vst [vmem:[#allocation5] sm:$0xff] %v21
    %24 = vst [vmem:[#allocation5 + $0x8] sm:$0xff] %v22
    // Predicated region
    $region10: #{tpu_custom_call.1} parent=1 // pred_check
      _
    $region11: #{tpu_custom_call.1} parent=1 // pred_check_branch
      %26 = sbr.rel (0) target = $region13
    $region12: #{tpu_custom_call.1} parent=1 // pred_region
      %s28 = ssub.s32 256, 256
      %29 = vsyncadd [#allocation4], %s28
      %s31 = sshll.u32 [#allocation5], 4
      %s32 = int_to_ptr.vmem [resolvable:$true] %s31
      %34 = dma.vmem_to_hbm [thread:$0]  %s32, 256, %s1, [#allocation4]
    $region13: #{tpu_custom_call.1} parent=1 // pred_fallthru
      _
    // Predicated region
    $region14: #{tpu_custom_call.1} parent=1 // pred_check
      _
    $region15: #{tpu_custom_call.1} parent=1 // pred_check_branch
      %36 = sbr.rel (0) target = $region17
    $region16: #{tpu_custom_call.1} parent=1 // pred_region
      %37 = dma.done [#allocation4], 256
    $region17: #{tpu_custom_call.1} parent=1 // pred_fallthru
      _
    %38 = vsyncpa [#allocation3], 1
    %39 = vsyncpa [#allocation4], 1

</llo_original>
